<compile_context>
chip_gen: v7x
topology: tpu7x:2x2x1
jax: 0.10.0
libtpu: 0.0.40
codegen_flags: <defaults>
</compile_context>

<pallas_src>
import jax
import jax.numpy as jnp
from jax import lax
from jax.experimental import pallas as pl
from jax.experimental.pallas import tpu as pltpu

TEMPERATURE = 0.07


def _nce_rowloss_kernel(q_ref, t_ref, out_ref):
    """One grid step = (batch group g, query-row tile r).

    q_ref:   (bt, C, tq) query rows [r*tq, (r+1)*tq)  (input dtype)
    t_ref:   (bt, C, L)  all target columns           (input dtype)
    out_ref: (bt, tq)    float32 per-row CE terms: logsumexp(row) - diagonal.
    """
    bt, c_dim, tq = q_ref.shape
    L = t_ref.shape[-1]
    inv_temp = jnp.float32(1.0 / TEMPERATURE)

    q = q_ref[...]                                             # (bt, C, tq)
    t = t_ref[...]                                             # (bt, C, L)

    # Fold 1/T into q once (O(bt*C*tq)) instead of scaling the (bt, tq, L)
    # logits (O(bt*tq*L)); keep the MXU operands in the input dtype.
    q_s = (q.astype(jnp.float32) * inv_temp).astype(q.dtype)

    # Gram strip on the MXU, contracting the C (sublane) axis directly:
    # logits[b, i, j] = sum_c q_s[b, c, i] * t[b, c, j]   (A^T.B form).
    logits = lax.dot_general(
        q_s, t,
        dimension_numbers=(((1,), (1,)), ((0,), (0,))),
        preferred_element_type=jnp.float32,
    )                                                          # (bt, tq, L)

    # Diagonal (the "label == row index" logit), exactly in f32 on the VPU:
    # diag[b, i] = (1/T) * sum_c q[b, c, i] * t[b, c, r*tq + i].
    if tq == L:
        t_diag = t                                             # single row tile
    else:
        col0 = pl.multiple_of(pl.program_id(1) * tq, tq)
        t_diag = t_ref[:, :, pl.ds(col0, tq)]                  # (bt, C, tq)
    diag = jnp.sum(q.astype(jnp.float32) * t_diag.astype(jnp.float32),
                   axis=1) * inv_temp                          # (bt, tq)

    # Row-wise logsumexp in f32.
    row_max = jnp.max(logits, axis=-1, keepdims=True)          # (bt, tq, 1)
    lse = row_max[..., 0] + jnp.log(
        jnp.sum(jnp.exp(logits - row_max), axis=-1))           # (bt, tq)

    out_ref[...] = lse - diag


def _ceil_to(x, m):
    return ((x + m - 1) // m) * m


def _choose_row_tile(L):
    """Largest MXU-friendly (multiple-of-128) query-row tile dividing L,
    falling back to a single full-L row tile."""
    for t in (256, 128):
        if t <= L and L % t == 0:
            return t
    return L


def _choose_block_batch(B, C, L, tq, itemsize,
                        vmem_budget_bytes=20 * 1024 * 1024,
                        min_grid_steps=4):
    """Largest divisor of B whose *padded* per-step working set fits the
    budget, preferring choices that leave >= min_grid_steps total grid steps
    (DMA pipelining + v7x megacore sharding)."""
    c_pad = _ceil_to(C, 8)            # C rides the sublane axis
    l_pad = _ceil_to(L, 128)          # lane padding of the target tile
    tq_pad = _ceil_to(tq, 128)        # lane padding of the q tile / output
    row_tiles = L // tq

    def step_bytes(bt):
        q_in = 2 * bt * c_pad * tq_pad * itemsize       # double-buffered q tile
        t_in = 2 * bt * c_pad * l_pad * itemsize        # double-buffered t tile
        logits = int(2.5 * bt * tq_pad * l_pad * 4)     # f32 logits + exp temp
        out = 2 * bt * tq_pad * 4                       # double-buffered output
        return q_in + t_in + logits + out

    # Output block is (bt, tq): keep its sublane dim layout-legal
    # (bt == B or a multiple of 8).
    legal = [bt for bt in range(B, 0, -1)
             if B % bt == 0 and (bt == B or bt % 8 == 0)]
    fitting = [bt for bt in legal if step_bytes(bt) <= vmem_budget_bytes]
    if not fitting:
        fitting = legal[-1:]          # smallest legal tile
    for bt in fitting:                # largest bt that still has grid depth
        if (B // bt) * row_tiles >= min_grid_steps:
            return bt
    return fitting[-1]                # best achievable depth (smallest fit)


def intra_image_nce_loss(query, target, *, intraimage_num_locations):
    """query, target: (B, C, H, W) arrays (NCHW, same as the PyTorch module)."""
    B, C, H, W = query.shape
    L = min(H * W, intraimage_num_locations)

    # torch.randperm(num_locations) permutes the FIRST L flattened positions;
    # applied identically to query & target with labels == arange(L), the mean
    # CE loss is invariant under that permutation, so a contiguous [:, :, :L]
    # slice gives the identical loss and avoids a random-access HBM gather.
    q = query.reshape(B, C, H * W)
    t = target.reshape(B, C, H * W)
    if L < H * W:
        q = q[:, :, :L]
        t = t[:, :, :L]

    itemsize = jnp.dtype(query.dtype).itemsize
    tq = _choose_row_tile(L)
    bt = _choose_block_batch(B, C, L, tq, itemsize)
    num_groups = B // bt
    num_row_tiles = L // tq

    cost = pl.CostEstimate(
        flops=2 * B * L * L * C + 4 * B * L * L,     # Gram matmul + softmax VPU
        transcendentals=B * L * L,                   # exp per logit (+ log)
        bytes_accessed=2 * B * C * L * itemsize + B * L * 4,
    )

    row_losses = pl.pallas_call(
        _nce_rowloss_kernel,
        out_shape=jax.ShapeDtypeStruct((B, L), jnp.float32),
        grid_spec=pltpu.PrefetchScalarGridSpec(
            num_scalar_prefetch=0,
            grid=(num_groups, num_row_tiles),
            in_specs=[
                # q rows for this tile: C on sublanes, query rows on lanes.
                pl.BlockSpec((bt, C, tq), lambda g, r: (g, 0, r)),
                # all target columns for this batch group (reused across r).
                pl.BlockSpec((bt, C, L), lambda g, r: (g, 0, 0)),
            ],
            out_specs=pl.BlockSpec((bt, tq), lambda g, r: (g, r)),
        ),
        compiler_params=pltpu.CompilerParams(
            # Every output block is independent: both axes shard across
            # TensorCores (v7x megacore) and pipeline freely.
            dimension_semantics=("parallel", "parallel"),
            vmem_limit_bytes=48 * 1024 * 1024,
        ),
        cost_estimate=cost,
    )(q, t)

    # nn.CrossEntropyLoss(reduction='mean') over the B * L rows.
    return jnp.sum(row_losses) / jnp.float32(B * L)


def _reference_loss(query, target, *, intraimage_num_locations, perm_key):
    """Pure-JAX reference mirroring the PyTorch module (including the random
    permutation gather, which the kernel drops because the mean CE loss is
    invariant under it).  CE(logits, arange) == mean(logsumexp - diag)."""
    B, C, H, W = query.shape
    L = min(H * W, intraimage_num_locations)
    patch_ids = jax.random.permutation(perm_key, L)
    q = query.reshape(B, C, H * W)[:, :, patch_ids].astype(jnp.float32)
    t = target.reshape(B, C, H * W)[:, :, patch_ids].astype(jnp.float32)
    logits = jnp.einsum("bcl,bcm->blm", q, t) / TEMPERATURE        # (B, L, L)
    lse = jax.scipy.special.logsumexp(logits, axis=-1)             # (B, L)
    diag = jnp.sum(q * t, axis=1) / TEMPERATURE                    # (B, L)
    return jnp.mean(lse - diag)


if __name__ == "__main__":
    B, C, H, W = 2, 4, 16, 16
    intraimage_num_locations = 64  # opt.intraimage_num_locations

    key = jax.random.PRNGKey(0)
    kq, kt, kperm = jax.random.split(key, 3)
    query = jax.random.normal(kq, (B, C, H, W), dtype=jnp.float32)
    target = jax.random.normal(kt, (B, C, H, W), dtype=jnp.float32)

    loss = intra_image_nce_loss(
        query, target, intraimage_num_locations=intraimage_num_locations
    )
    loss = jax.block_until_ready(loss)

    ref = _reference_loss(
        query,
        target,
        intraimage_num_locations=intraimage_num_locations,
        perm_key=kperm,
    )
    assert jnp.allclose(loss, ref, rtol=1e-4, atol=1e-4), (loss, ref)

    print("KERNEL_OK")
</pallas_src>

<mosaic_0001>
module attributes {stable_mosaic.version = 11 : i64} {
  func.func @_nce_rowloss_kernel(%arg0: i32, %arg1: i32, %arg2: memref<2x4x64xf32, #tpu.memory_space<vmem>>, %arg3: memref<2x4x64xf32, #tpu.memory_space<vmem>>, %arg4: memref<2x64xf32, #tpu.memory_space<vmem>>) attributes {dimension_semantics = [#tpu.dimension_semantics<parallel>, #tpu.dimension_semantics<parallel>], iteration_bounds = array<i64: 1, 1>, scalar_prefetch = 0 : i64, scratch_operands = 0 : i64, tpu.core_type = #tpu.core_type<tc>, window_params = [{transform_indices = @transform_0, window_bounds = array<i64: 2, 4, 64>}, {transform_indices = @transform_1, window_bounds = array<i64: 2, 4, 64>}, {transform_indices = @transform_2, window_bounds = array<i64: 2, 64>}]} {
    %c0 = arith.constant 0 : index
    %c0_0 = arith.constant 0 : index
    %c0_1 = arith.constant 0 : index
    %0 = vector.load %arg2[%c0, %c0_0, %c0_1] : memref<2x4x64xf32, #tpu.memory_space<vmem>>, vector<2x4x64xf32>
    %c0_2 = arith.constant 0 : index
    %c0_3 = arith.constant 0 : index
    %c0_4 = arith.constant 0 : index
    %1 = vector.load %arg3[%c0_2, %c0_3, %c0_4] : memref<2x4x64xf32, #tpu.memory_space<vmem>>, vector<2x4x64xf32>
    %cst = arith.constant 14.2857141 : f32
    %2 = vector.broadcast %cst : f32 to vector<2x4x64xf32>
    %3 = arith.mulf %0, %2 : vector<2x4x64xf32>
    %cst_5 = arith.constant dense<0.000000e+00> : vector<2x64x64xf32>
    %4 = tpu.matmul %3, %1, %cst_5 {dimension_numbers = #tpu.dot_dimension_numbers<[1], [1], [2], [2], [0, 0, 0, 2, 1, 2], [0], [0]>} : vector<2x4x64xf32>, vector<2x4x64xf32>, vector<2x64x64xf32> -> vector<2x64x64xf32>
    %5 = arith.mulf %0, %1 : vector<2x4x64xf32>
    %cst_6 = arith.constant dense<0.000000e+00> : vector<2x64xf32>
    %6 = vector.multi_reduction <add>, %5, %cst_6 [1] : vector<2x4x64xf32> to vector<2x64xf32>
    %cst_7 = arith.constant 14.2857141 : f32
    %7 = vector.broadcast %cst_7 : f32 to vector<2x64xf32>
    %8 = arith.mulf %6, %7 : vector<2x64xf32>
    %cst_8 = arith.constant dense<0xFF800000> : vector<2x64xf32>
    %9 = vector.multi_reduction <maximumf>, %4, %cst_8 [2] : vector<2x64x64xf32> to vector<2x64xf32>
    %10 = vector.shape_cast %9 : vector<2x64xf32> to vector<2x64x1xf32>
    %11 = vector.shape_cast %10 : vector<2x64x1xf32> to vector<2x64xf32>
    %12 = vector.broadcast %10 : vector<2x64x1xf32> to vector<2x64x64xf32>
    %13 = arith.subf %4, %12 : vector<2x64x64xf32>
    %14 = math.exp %13 : vector<2x64x64xf32>
    %cst_9 = arith.constant dense<0.000000e+00> : vector<2x64xf32>
    %15 = vector.multi_reduction <add>, %14, %cst_9 [2] : vector<2x64x64xf32> to vector<2x64xf32>
    %16 = math.log %15 : vector<2x64xf32>
    %17 = arith.addf %11, %16 : vector<2x64xf32>
    %18 = arith.subf %17, %8 : vector<2x64xf32>
    %c0_10 = arith.constant 0 : index
    %c0_11 = arith.constant 0 : index
    %19 = vector.load %arg4[%c0_10, %c0_11] : memref<2x64xf32, #tpu.memory_space<vmem>>, vector<2x64xf32>
    tpu.vector_store %arg4[%c0_10, %c0_11], %18 {strides = array<i32>} : memref<2x64xf32, #tpu.memory_space<vmem>>, vector<2x64xf32>,
    return
  }
  func.func @transform_0(%arg0: i32, %arg1: i32) -> (i32, i32, i32) {
    %c0_i32 = arith.constant 0 : i32
    %c0_i32_0 = arith.constant 0 : i32
    return %arg0, %c0_i32, %arg1 : i32, i32, i32
  }
  func.func @transform_1(%arg0: i32, %arg1: i32) -> (i32, i32, i32) {
    %c0_i32 = arith.constant 0 : i32
    %c0_i32_0 = arith.constant 0 : i32
    %c0_i32_1 = arith.constant 0 : i32
    return %arg0, %c0_i32, %c0_i32_0 : i32, i32, i32
  }
  func.func @transform_2(%arg0: i32, %arg1: i32) -> (i32, i32) {
    %c0_i32 = arith.constant 0 : i32
    return %arg0, %arg1 : i32, i32
  }
}

</mosaic_0001>

<llo_original>
// kernel: tpu_custom_call.1
$region0: #{tpu_custom_call.1}
  #allocation0 [shape = 'u32[]', space=smem, size = 0x4, offset = 0x4, fixed_abs, tag = 'smem constant byte address 0x4 - core index']
  #allocation1 [shape = 'u32[144,128]{1,0:T(1,128)}', space=vmem, size = 0x12000, scoped, tag = 'internal scratch']
  %s0 = inlined_call_operand.hbm [shape: f32[2,4,64], index: 0, kind: input, shape index: {}]
  %s1 = inlined_call_operand.hbm [shape: f32[2,4,64], index: 1, kind: input, shape index: {}]
  %s2 = inlined_call_operand.hbm [shape: f32[2,64], index: 2, kind: output, shape index: {}]
  %s3 = sld [smem:[#allocation0]]
  $region26: #{tpu_custom_call.1} parent=0
    _
  %s5 = ssub.s32 1, %s3
  %s6 = scalar_select 0, %s5, %s3
  $region1: #{tpu_custom_call.1} parent=0
    #allocation2 [shape = 'u8[4096]{0}', space=vmem, size = 0x1000, scoped, tag = 'input window, operand 0, single buffered']
    #allocation3 [shape = 's32[1]{0}', space=sflag, size = 0x4, scoped, tag = 'scoped memory for tpu_custom_call.1']
    #allocation4 [shape = 's32[1]{0}', space=sflag, size = 0x4, scoped, tag = 'scoped memory for tpu_custom_call.1']
    #allocation5 [shape = 'u8[4096]{0}', space=vmem, size = 0x1000, scoped, tag = 'input window, operand 1, single buffered']
    #allocation6 [shape = 's32[1]{0}', space=sflag, size = 0x4, scoped, tag = 'scoped memory for tpu_custom_call.1']
    #allocation7 [shape = 'u8[1024]{0}', space=vmem, size = 0x400, scoped, tag = 'output window, operand 0, single buffered']
    %7 = vsyncpa [#allocation3], 0
    %8 = vsyncpa [#allocation6], 0
    %9 = vsyncpa [#allocation4], 0
    // Predicated region
    $region2: #{tpu_custom_call.1} parent=1 // pred_check
      _
    $region3: #{tpu_custom_call.1} parent=1 // pred_check_branch
      %11 = sbr.rel (0) target = $region5
    $region4: #{tpu_custom_call.1} parent=1 // pred_region
      %s13 = ssub.s32 128, 128
      %14 = vsyncadd [#allocation3], %s13
      %s15 = sshll.u32 [#allocation2], 4
      %s16 = int_to_ptr.vmem [resolvable:$true] %s15
      %21 = dma.hbm_to_vmem [thread:$0]  %s0, 128, %s16, [#allocation3], 64, 64, 4
    $region5: #{tpu_custom_call.1} parent=1 // pred_fallthru
      _
    // Predicated region
    $region6: #{tpu_custom_call.1} parent=1 // pred_check
      _
    $region7: #{tpu_custom_call.1} parent=1 // pred_check_branch
      %23 = sbr.rel (0) target = $region9
    $region8: #{tpu_custom_call.1} parent=1 // pred_region
      %s25 = ssub.s32 128, 128
      %26 = vsyncadd [#allocation6], %s25
      %s27 = sshll.u32 [#allocation5], 4
      %s28 = int_to_ptr.vmem [resolvable:$true] %s27
      %33 = dma.hbm_to_vmem [thread:$0]  %s1, 128, %s28, [#allocation6], 64, 64, 4
    $region9: #{tpu_custom_call.1} parent=1 // pred_fallthru
      _
    // Predicated region
    $region10: #{tpu_custom_call.1} parent=1 // pred_check
      _
    $region11: #{tpu_custom_call.1} parent=1 // pred_check_branch
      %35 = sbr.rel (0) target = $region13
    $region12: #{tpu_custom_call.1} parent=1 // pred_region
      %36 = dma.done [#allocation3], 128
    $region13: #{tpu_custom_call.1} parent=1 // pred_fallthru
      _
    // Predicated region
    $region14: #{tpu_custom_call.1} parent=1 // pred_check
      _
    $region15: #{tpu_custom_call.1} parent=1 // pred_check_branch
      %38 = sbr.rel (0) target = $region17
    $region16: #{tpu_custom_call.1} parent=1 // pred_region
      %39 = dma.done [#allocation6], 128
    $region17: #{tpu_custom_call.1} parent=1 // pred_fallthru
      _
    %v40 = vld [vmem:[#allocation2] sm:$0xf]
    %v41 = vld [vmem:[#allocation2 + $0x4] sm:$0xf]
    %v42 = vld [vmem:[#allocation5] sm:$0xf]
    %v43 = vld [vmem:[#allocation5 + $0x4] sm:$0xf]
    %v44 = vmul.f32 %v40, 14.285714
    %v45 = vmul.f32 %v41, 14.285714
    %46 = vxpose.xlu0.b32.start [1/16] %v44, 128
    %47 = vxpose.xlu0.b32.cont [2/16] 0.0, 128
    %48 = vxpose.xlu0.b32.cont [3/16] 0.0, 128
    %49 = vxpose.xlu0.b32.cont [4/16] 0.0, 128
    %50 = vxpose.xlu0.b32.cont [5/16] 0.0, 128
    %51 = vxpose.xlu0.b32.cont [6/16] 0.0, 128
    %52 = vxpose.xlu0.b32.cont [7/16] 0.0, 128
    %53 = vxpose.xlu0.b32.cont [8/16] 0.0, 128
    %54 = vxpose.xlu0.b32.cont [9/16] 0.0, 128
    %55 = vxpose.xlu0.b32.cont [10/16] 0.0, 128
    %56 = vxpose.xlu0.b32.cont [11/16] 0.0, 128
    %57 = vxpose.xlu0.b32.cont [12/16] 0.0, 128
    %58 = vxpose.xlu0.b32.cont [13/16] 0.0, 128
    %59 = vxpose.xlu0.b32.cont [14/16] 0.0, 128
    %60 = vxpose.xlu0.b32.cont [15/16] 0.0, 128
    %61 = vxpose.xlu0.b32.end [16/16] 0.0, 128
    %v62 = vpop.trf.xlu0
    %v63 = vpop.trf.xlu0
    %v64 = vpop.trf.xlu0
    %v65 = vpop.trf.xlu0
    %v66 = vpop.trf.xlu0
    %v67 = vpop.trf.xlu0
    %v68 = vpop.trf.xlu0
    %v69 = vpop.trf.xlu0
    %v70 = vpop.trf.xlu0
    %v71 = vpop.trf.xlu0
    %v72 = vpop.trf.xlu0
    %v73 = vpop.trf.xlu0
    %v74 = vpop.trf.xlu0
    %v75 = vpop.trf.xlu0
    %v76 = vpop.trf.xlu0
    %v77 = vpop.trf.xlu0
    %vm78 = vcmask 31744
    %v80 = vsel %vm78, %v62, 0
    %v83 = vsel %vm78, %v63, 0
    %v86 = vsel %vm78, %v64, 0
    %v89 = vsel %vm78, %v65, 0
    %v92 = vsel %vm78, %v66, 0
    %v95 = vsel %vm78, %v67, 0
    %v98 = vsel %vm78, %v68, 0
    %v101 = vsel %vm78, %v69, 0
    %vm103 = vcmask 1043456
    %v105 = vsel %vm103, %v42, 0
    %107 = vmatprep.subr.mxu0 0.0
    %108 = vmatpush1.msra.mxu0 %v105
    %109 = vmatprep.subr.mxu0 0.0
    %110 = vmatpush1.msra.mxu0 0.0
    %111 = vmatprep.subr.mxu0 0.0
    %112 = vmatpush1.msra.mxu0 0.0
    %113 = vmatprep.subr.mxu0 0.0
    %114 = vmatpush1.msra.mxu0 0.0
    %115 = vmatprep.subr.mxu0 0.0
    %116 = vmatpush1.msra.mxu0 0.0
    %117 = vmatprep.subr.mxu0 0.0
    %118 = vmatpush1.msra.mxu0 0.0
    %119 = vmatprep.subr.mxu0 0.0
    %120 = vmatpush1.msra.mxu0 0.0
    %121 = vmatprep.subr.mxu0 0.0
    %122 = vmatpush1.msra.mxu0 0.0
    %123 = vmatprep.subr.mxu0 0.0
    %124 = vmatpush1.msra.mxu0 0.0
    %125 = vmatprep.subr.mxu0 0.0
    %126 = vmatpush1.msra.mxu0 0.0
    %127 = vmatprep.subr.mxu0 0.0
    %128 = vmatpush1.msra.mxu0 0.0
    %129 = vmatprep.subr.mxu0 0.0
    %130 = vmatpush1.msra.mxu0 0.0
    %131 = vmatprep.subr.mxu0 0.0
    %132 = vmatpush1.msra.mxu0 0.0
    %133 = vmatprep.subr.mxu0 0.0
    %134 = vmatpush1.msra.mxu0 0.0
    %135 = vmatprep.subr.mxu0 0.0
    %136 = vmatpush1.msra.mxu0 0.0
    %137 = vmatprep.subr.mxu0 0.0
    %138 = vmatpush1.msra.mxu0 0.0
    %139 = vmatprep.subr.mxu0 0.0
    %140 = vmatpush1.msra.mxu0 0.0
    %141 = vmatprep.subr.mxu0 0.0
    %142 = vmatpush1.msra.mxu0 0.0
    %143 = vmatprep.subr.mxu0 0.0
    %144 = vmatpush1.msra.mxu0 0.0
    %145 = vmatprep.subr.mxu0 0.0
    %146 = vmatpush1.msra.mxu0 0.0
    %147 = vmatprep.subr.mxu0 0.0
    %148 = vmatpush1.msra.mxu0 0.0
    %149 = vmatprep.subr.mxu0 0.0
    %150 = vmatpush1.msra.mxu0 0.0
    %151 = vmatprep.subr.mxu0 0.0
    %152 = vmatpush1.msra.mxu0 0.0
    %153 = vmatprep.subr.mxu0 0.0
    %154 = vmatpush1.msra.mxu0 0.0
    %155 = vmatprep.subr.mxu0 0.0
    %156 = vmatpush1.msra.mxu0 0.0
    %157 = vmatprep.subr.mxu0 0.0
    %158 = vmatpush1.msra.mxu0 0.0
    %159 = vmatprep.subr.mxu0 0.0
    %160 = vmatpush1.msra.mxu0 0.0
    %161 = vmatprep.subr.mxu0 0.0
    %162 = vmatpush1.msra.mxu0 0.0
    %163 = vmatprep.subr.mxu0 0.0
    %164 = vmatpush1.msra.mxu0 0.0
    %165 = vmatprep.subr.mxu0 0.0
    %166 = vmatpush1.msra.mxu0 0.0
    %167 = vmatprep.subr.mxu0 0.0
    %168 = vmatpush1.msra.mxu0 0.0
    %169 = vmatprep.subr.mxu0 0.0
    %170 = vmatpush1.msra.mxu0 0.0
    %171 = vmatprep.mubr.f32.mxu0 0.0
    %172 = vmatmul.mubr.f32.gmra.mrb[0].mxu0 %v80
    %v173 = vpop.f32.mrb[0].mxu0
    %v174 = vadd.f32 0.0, %v173
    %v175 = vpop.f32.mrb[0].mxu0
    %176 = vmatprep.mubr.f32.mxu0 0.0
    %177 = vmatmul.mubr.f32.gmra.mrb[0].mxu0 %v83
    %v178 = vpop.f32.mrb[0].mxu0
    %v179 = vadd.f32 0.0, %v178
    %v180 = vpop.f32.mrb[0].mxu0
    %181 = vmatprep.mubr.f32.mxu0 0.0
    %182 = vmatmul.mubr.f32.gmra.mrb[0].mxu0 %v86
    %v183 = vpop.f32.mrb[0].mxu0
    %v184 = vadd.f32 0.0, %v183
    %v185 = vpop.f32.mrb[0].mxu0
    %186 = vmatprep.mubr.f32.mxu0 0.0
    %187 = vmatmul.mubr.f32.gmra.mrb[0].mxu0 %v89
    %v188 = vpop.f32.mrb[0].mxu0
    %v189 = vadd.f32 0.0, %v188
    %v190 = vpop.f32.mrb[0].mxu0
    %191 = vmatprep.mubr.f32.mxu0 0.0
    %192 = vmatmul.mubr.f32.gmra.mrb[0].mxu0 %v92
    %v193 = vpop.f32.mrb[0].mxu0
    %v194 = vadd.f32 0.0, %v193
    %v195 = vpop.f32.mrb[0].mxu0
    %196 = vmatprep.mubr.f32.mxu0 0.0
    %197 = vmatmul.mubr.f32.gmra.mrb[0].mxu0 %v95
    %v198 = vpop.f32.mrb[0].mxu0
    %v199 = vadd.f32 0.0, %v198
    %v200 = vpop.f32.mrb[0].mxu0
    %201 = vmatprep.mubr.f32.mxu0 0.0
    %202 = vmatmul.mubr.f32.gmra.mrb[0].mxu0 %v98
    %v203 = vpop.f32.mrb[0].mxu0
    %v204 = vadd.f32 0.0, %v203
    %v205 = vpop.f32.mrb[0].mxu0
    %206 = vmatprep.mubr.f32.mxu0 0.0
    %207 = vmatmul.mubr.f32.gmra.mrb[0].mxu0 %v101
    %v208 = vpop.f32.mrb[0].mxu0
    %v209 = vadd.f32 0.0, %v208
    %v210 = vpop.f32.mrb[0].mxu0
    %211 = vdwg.mxu0
    %212 = vxpose.xlu0.b32.start [1/16] %v45, 128
    %213 = vxpose.xlu0.b32.cont [2/16] 0.0, 128
    %214 = vxpose.xlu0.b32.cont [3/16] 0.0, 128
    %215 = vxpose.xlu0.b32.cont [4/16] 0.0, 128
    %216 = vxpose.xlu0.b32.cont [5/16] 0.0, 128
    %217 = vxpose.xlu0.b32.cont [6/16] 0.0, 128
    %218 = vxpose.xlu0.b32.cont [7/16] 0.0, 128
    %219 = vxpose.xlu0.b32.cont [8/16] 0.0, 128
    %220 = vxpose.xlu0.b32.cont [9/16] 0.0, 128
    %221 = vxpose.xlu0.b32.cont [10/16] 0.0, 128
    %222 = vxpose.xlu0.b32.cont [11/16] 0.0, 128
    %223 = vxpose.xlu0.b32.cont [12/16] 0.0, 128
    %224 = vxpose.xlu0.b32.cont [13/16] 0.0, 128
    %225 = vxpose.xlu0.b32.cont [14/16] 0.0, 128
    %226 = vxpose.xlu0.b32.cont [15/16] 0.0, 128
    %227 = vxpose.xlu0.b32.end [16/16] 0.0, 128
    %v228 = vpop.trf.xlu0
    %v229 = vpop.trf.xlu0
    %v230 = vpop.trf.xlu0
    %v231 = vpop.trf.xlu0
    %v232 = vpop.trf.xlu0
    %v233 = vpop.trf.xlu0
    %v234 = vpop.trf.xlu0
    %v235 = vpop.trf.xlu0
    %v236 = vpop.trf.xlu0
    %v237 = vpop.trf.xlu0
    %v238 = vpop.trf.xlu0
    %v239 = vpop.trf.xlu0
    %v240 = vpop.trf.xlu0
    %v241 = vpop.trf.xlu0
    %v242 = vpop.trf.xlu0
    %v243 = vpop.trf.xlu0
    %v245 = vsel %vm78, %v228, 0
    %v248 = vsel %vm78, %v229, 0
    %v251 = vsel %vm78, %v230, 0
    %v254 = vsel %vm78, %v231, 0
    %v257 = vsel %vm78, %v232, 0
    %v260 = vsel %vm78, %v233, 0
    %v263 = vsel %vm78, %v234, 0
    %v266 = vsel %vm78, %v235, 0
    %v269 = vsel %vm103, %v43, 0
    %271 = vmatprep.subr.mxu0 0.0
    %272 = vmatpush1.msra.mxu0 %v269
    %273 = vmatprep.subr.mxu0 0.0
    %274 = vmatpush1.msra.mxu0 0.0
    %275 = vmatprep.subr.mxu0 0.0
    %276 = vmatpush1.msra.mxu0 0.0
    %277 = vmatprep.subr.mxu0 0.0
    %278 = vmatpush1.msra.mxu0 0.0
    %279 = vmatprep.subr.mxu0 0.0
    %280 = vmatpush1.msra.mxu0 0.0
    %281 = vmatprep.subr.mxu0 0.0
    %282 = vmatpush1.msra.mxu0 0.0
    %283 = vmatprep.subr.mxu0 0.0
    %284 = vmatpush1.msra.mxu0 0.0
    %285 = vmatprep.subr.mxu0 0.0
    %286 = vmatpush1.msra.mxu0 0.0
    %287 = vmatprep.subr.mxu0 0.0
    %288 = vmatpush1.msra.mxu0 0.0
    %289 = vmatprep.subr.mxu0 0.0
    %290 = vmatpush1.msra.mxu0 0.0
    %291 = vmatprep.subr.mxu0 0.0
    %292 = vmatpush1.msra.mxu0 0.0
    %293 = vmatprep.subr.mxu0 0.0
    %294 = vmatpush1.msra.mxu0 0.0
    %295 = vmatprep.subr.mxu0 0.0
    %296 = vmatpush1.msra.mxu0 0.0
    %297 = vmatprep.subr.mxu0 0.0
    %298 = vmatpush1.msra.mxu0 0.0
    %299 = vmatprep.subr.mxu0 0.0
    %300 = vmatpush1.msra.mxu0 0.0
    %301 = vmatprep.subr.mxu0 0.0
    %302 = vmatpush1.msra.mxu0 0.0
    %303 = vmatprep.subr.mxu0 0.0
    %304 = vmatpush1.msra.mxu0 0.0
    %305 = vmatprep.subr.mxu0 0.0
    %306 = vmatpush1.msra.mxu0 0.0
    %307 = vmatprep.subr.mxu0 0.0
    %308 = vmatpush1.msra.mxu0 0.0
    %309 = vmatprep.subr.mxu0 0.0
    %310 = vmatpush1.msra.mxu0 0.0
    %311 = vmatprep.subr.mxu0 0.0
    %312 = vmatpush1.msra.mxu0 0.0
    %313 = vmatprep.subr.mxu0 0.0
    %314 = vmatpush1.msra.mxu0 0.0
    %315 = vmatprep.subr.mxu0 0.0
    %316 = vmatpush1.msra.mxu0 0.0
    %317 = vmatprep.subr.mxu0 0.0
    %318 = vmatpush1.msra.mxu0 0.0
    %319 = vmatprep.subr.mxu0 0.0
    %320 = vmatpush1.msra.mxu0 0.0
    %321 = vmatprep.subr.mxu0 0.0
    %322 = vmatpush1.msra.mxu0 0.0
    %323 = vmatprep.subr.mxu0 0.0
    %324 = vmatpush1.msra.mxu0 0.0
    %325 = vmatprep.subr.mxu0 0.0
    %326 = vmatpush1.msra.mxu0 0.0
    %327 = vmatprep.subr.mxu0 0.0
    %328 = vmatpush1.msra.mxu0 0.0
    %329 = vmatprep.subr.mxu0 0.0
    %330 = vmatpush1.msra.mxu0 0.0
    %331 = vmatprep.subr.mxu0 0.0
    %332 = vmatpush1.msra.mxu0 0.0
    %333 = vmatprep.subr.mxu0 0.0
    %334 = vmatpush1.msra.mxu0 0.0
    %335 = vmatprep.mubr.f32.mxu0 0.0
    %336 = vmatmul.mubr.f32.gmra.mrb[0].mxu0 %v245
    %v337 = vpop.f32.mrb[0].mxu0
    %v338 = vadd.f32 0.0, %v337
    %v339 = vpop.f32.mrb[0].mxu0
    %340 = vmatprep.mubr.f32.mxu0 0.0
    %341 = vmatmul.mubr.f32.gmra.mrb[0].mxu0 %v248
    %v342 = vpop.f32.mrb[0].mxu0
    %v343 = vadd.f32 0.0, %v342
    %v344 = vpop.f32.mrb[0].mxu0
    %345 = vmatprep.mubr.f32.mxu0 0.0
    %346 = vmatmul.mubr.f32.gmra.mrb[0].mxu0 %v251
    %v347 = vpop.f32.mrb[0].mxu0
    %v348 = vadd.f32 0.0, %v347
    %v349 = vpop.f32.mrb[0].mxu0
    %350 = vmatprep.mubr.f32.mxu0 0.0
    %351 = vmatmul.mubr.f32.gmra.mrb[0].mxu0 %v254
    %v352 = vpop.f32.mrb[0].mxu0
    %v353 = vadd.f32 0.0, %v352
    %v354 = vpop.f32.mrb[0].mxu0
    %355 = vmatprep.mubr.f32.mxu0 0.0
    %356 = vmatmul.mubr.f32.gmra.mrb[0].mxu0 %v257
    %v357 = vpop.f32.mrb[0].mxu0
    %v358 = vadd.f32 0.0, %v357
    %v359 = vpop.f32.mrb[0].mxu0
    %360 = vmatprep.mubr.f32.mxu0 0.0
    %361 = vmatmul.mubr.f32.gmra.mrb[0].mxu0 %v260
    %v362 = vpop.f32.mrb[0].mxu0
    %v363 = vadd.f32 0.0, %v362
    %v364 = vpop.f32.mrb[0].mxu0
    %365 = vmatprep.mubr.f32.mxu0 0.0
    %366 = vmatmul.mubr.f32.gmra.mrb[0].mxu0 %v263
    %v367 = vpop.f32.mrb[0].mxu0
    %v368 = vadd.f32 0.0, %v367
    %v369 = vpop.f32.mrb[0].mxu0
    %370 = vmatprep.mubr.f32.mxu0 0.0
    %371 = vmatmul.mubr.f32.gmra.mrb[0].mxu0 %v266
    %v372 = vpop.f32.mrb[0].mxu0
    %v373 = vadd.f32 0.0, %v372
    %v374 = vpop.f32.mrb[0].mxu0
    %375 = vdwg.mxu0
    %v376 = vmul.f32 %v40, %v42
    %v377 = vmul.f32 %v41, %v43
    %vm378 = vcmask 519168
    %v379 = vsel %vm378, %v376, 0.0
    %v380 = vrot.slane %v379, 4
    %v381 = vadd.f32 %v379, %v380
    %v382 = vrot.slane %v381, 2
    %v383 = vadd.f32 %v381, %v382
    %v384 = vrot.slane %v383, 1
    %v385 = vadd.f32 %v383, %v384
    %v386 = vsel %vm378, %v377, 0.0
    %v387 = vrot.slane %v386, 4
    %v388 = vadd.f32 %v386, %v387
    %v389 = vrot.slane %v388, 2
    %v390 = vadd.f32 %v388, %v389
    %v391 = vrot.slane %v390, 1
    %v392 = vadd.f32 %v390, %v391
    %v393 = vmul.f32 %v385, 14.285714
    %v394 = vmul.f32 %v392, 14.285714
    %vm395 = vcmask 523264
    %v396 = vsel %vm395, %v174, -inf
    %397 = vmax.xlane.f32.xlu0 %v396
    %v398 = vpop.xlane.xlu0 %397
    %v399 = vsel %vm395, %v179, -inf
    %400 = vmax.xlane.f32.xlu0 %v399
    %v401 = vpop.xlane.xlu0 %400
    %v402 = vsel %vm395, %v184, -inf
    %403 = vmax.xlane.f32.xlu0 %v402
    %v404 = vpop.xlane.xlu0 %403
    %v405 = vsel %vm395, %v189, -inf
    %406 = vmax.xlane.f32.xlu0 %v405
    %v407 = vpop.xlane.xlu0 %406
    %v408 = vsel %vm395, %v194, -inf
    %409 = vmax.xlane.f32.xlu0 %v408
    %v410 = vpop.xlane.xlu0 %409
    %v411 = vsel %vm395, %v199, -inf
    %412 = vmax.xlane.f32.xlu0 %v411
    %v413 = vpop.xlane.xlu0 %412
    %v414 = vsel %vm395, %v204, -inf
    %415 = vmax.xlane.f32.xlu0 %v414
    %v416 = vpop.xlane.xlu0 %415
    %v417 = vsel %vm395, %v209, -inf
    %418 = vmax.xlane.f32.xlu0 %v417
    %v419 = vpop.xlane.xlu0 %418
    %v420 = vsel %vm395, %v338, -inf
    %421 = vmax.xlane.f32.xlu0 %v420
    %v422 = vpop.xlane.xlu0 %421
    %v423 = vsel %vm395, %v343, -inf
    %424 = vmax.xlane.f32.xlu0 %v423
    %v425 = vpop.xlane.xlu0 %424
    %v426 = vsel %vm395, %v348, -inf
    %427 = vmax.xlane.f32.xlu0 %v426
    %v428 = vpop.xlane.xlu0 %427
    %v429 = vsel %vm395, %v353, -inf
    %430 = vmax.xlane.f32.xlu0 %v429
    %v431 = vpop.xlane.xlu0 %430
    %v432 = vsel %vm395, %v358, -inf
    %433 = vmax.xlane.f32.xlu0 %v432
    %v434 = vpop.xlane.xlu0 %433
    %v435 = vsel %vm395, %v363, -inf
    %436 = vmax.xlane.f32.xlu0 %v435
    %v437 = vpop.xlane.xlu0 %436
    %v438 = vsel %vm395, %v368, -inf
    %439 = vmax.xlane.f32.xlu0 %v438
    %v440 = vpop.xlane.xlu0 %439
    %v441 = vsel %vm395, %v373, -inf
    %442 = vmax.xlane.f32.xlu0 %v441
    %v443 = vpop.xlane.xlu0 %442
    %v444 = vsub.f32 %v174, %v398
    %v445 = vsub.f32 %v179, %v401
    %v446 = vsub.f32 %v184, %v404
    %v447 = vsub.f32 %v189, %v407
    %v448 = vsub.f32 %v194, %v410
    %v449 = vsub.f32 %v199, %v413
    %v450 = vsub.f32 %v204, %v416
    %v451 = vsub.f32 %v209, %v419
    %v452 = vsub.f32 %v338, %v422
    %v453 = vsub.f32 %v343, %v425
    %v454 = vsub.f32 %v348, %v428
    %v455 = vsub.f32 %v353, %v431
    %v456 = vsub.f32 %v358, %v434
    %v457 = vsub.f32 %v363, %v437
    %v458 = vsub.f32 %v368, %v440
    %v459 = vsub.f32 %v373, %v443
    %v460 = vmul.f32 %v444, 1.442695
    %v461 = vpow.pop %v460
    %v462 = vmul.f32 %v445, 1.442695
    %v463 = vpow.pop %v462
    %v464 = vmul.f32 %v446, 1.442695
    %v465 = vpow.pop %v464
    %v466 = vmul.f32 %v447, 1.442695
    %v467 = vpow.pop %v466
    %v468 = vmul.f32 %v448, 1.442695
    %v469 = vpow.pop %v468
    %v470 = vmul.f32 %v449, 1.442695
    %v471 = vpow.pop %v470
    %v472 = vmul.f32 %v450, 1.442695
    %v473 = vpow.pop %v472
    %v474 = vmul.f32 %v451, 1.442695
    %v475 = vpow.pop %v474
    %v476 = vmul.f32 %v452, 1.442695
    %v477 = vpow.pop %v476
    %v478 = vmul.f32 %v453, 1.442695
    %v479 = vpow.pop %v478
    %v480 = vmul.f32 %v454, 1.442695
    %v481 = vpow.pop %v480
    %v482 = vmul.f32 %v455, 1.442695
    %v483 = vpow.pop %v482
    %v484 = vmul.f32 %v456, 1.442695
    %v485 = vpow.pop %v484
    %v486 = vmul.f32 %v457, 1.442695
    %v487 = vpow.pop %v486
    %v488 = vmul.f32 %v458, 1.442695
    %v489 = vpow.pop %v488
    %v490 = vmul.f32 %v459, 1.442695
    %v491 = vpow.pop %v490
    %v492 = vsel %vm395, %v461, 0.0
    %493 = vadd.xlane.f32.xlu0 %v492
    %v494 = vpop.xlane.xlu0 %493
    %v495 = vsel %vm395, %v463, 0.0
    %496 = vadd.xlane.f32.xlu0 %v495
    %v497 = vpop.xlane.xlu0 %496
    %v498 = vsel %vm395, %v465, 0.0
    %499 = vadd.xlane.f32.xlu0 %v498
    %v500 = vpop.xlane.xlu0 %499
    %v501 = vsel %vm395, %v467, 0.0
    %502 = vadd.xlane.f32.xlu0 %v501
    %v503 = vpop.xlane.xlu0 %502
    %v504 = vsel %vm395, %v469, 0.0
    %505 = vadd.xlane.f32.xlu0 %v504
    %v506 = vpop.xlane.xlu0 %505
    %v507 = vsel %vm395, %v471, 0.0
    %508 = vadd.xlane.f32.xlu0 %v507
    %v509 = vpop.xlane.xlu0 %508
    %v510 = vsel %vm395, %v473, 0.0
    %511 = vadd.xlane.f32.xlu0 %v510
    %v512 = vpop.xlane.xlu0 %511
    %v513 = vsel %vm395, %v475, 0.0
    %514 = vadd.xlane.f32.xlu0 %v513
    %v515 = vpop.xlane.xlu0 %514
    %v516 = vsel %vm395, %v477, 0.0
    %517 = vadd.xlane.f32.xlu0 %v516
    %v518 = vpop.xlane.xlu0 %517
    %v519 = vsel %vm395, %v479, 0.0
    %520 = vadd.xlane.f32.xlu0 %v519
    %v521 = vpop.xlane.xlu0 %520
    %v522 = vsel %vm395, %v481, 0.0
    %523 = vadd.xlane.f32.xlu0 %v522
    %v524 = vpop.xlane.xlu0 %523
    %v525 = vsel %vm395, %v483, 0.0
    %526 = vadd.xlane.f32.xlu0 %v525
    %v527 = vpop.xlane.xlu0 %526
    %v528 = vsel %vm395, %v485, 0.0
    %529 = vadd.xlane.f32.xlu0 %v528
    %v530 = vpop.xlane.xlu0 %529
    %v531 = vsel %vm395, %v487, 0.0
    %532 = vadd.xlane.f32.xlu0 %v531
    %v533 = vpop.xlane.xlu0 %532
    %v534 = vsel %vm395, %v489, 0.0
    %535 = vadd.xlane.f32.xlu0 %v534
    %v536 = vpop.xlane.xlu0 %535
    %v537 = vsel %vm395, %v491, 0.0
    %538 = vadd.xlane.f32.xlu0 %v537
    %v539 = vpop.xlane.xlu0 %538
    %v540 = vlog2.pop %v494
    %v541 = vmul.f32 %v540, 0.6931472
    %v542 = vlog2.pop %v497
    %v543 = vmul.f32 %v542, 0.6931472
    %v544 = vlog2.pop %v500
    %v545 = vmul.f32 %v544, 0.6931472
    %v546 = vlog2.pop %v503
    %v547 = vmul.f32 %v546, 0.6931472
    %v548 = vlog2.pop %v506
    %v549 = vmul.f32 %v548, 0.6931472
    %v550 = vlog2.pop %v509
    %v551 = vmul.f32 %v550, 0.6931472
    %v552 = vlog2.pop %v512
    %v553 = vmul.f32 %v552, 0.6931472
    %v554 = vlog2.pop %v515
    %v555 = vmul.f32 %v554, 0.6931472
    %v556 = vlog2.pop %v518
    %v557 = vmul.f32 %v556, 0.6931472
    %v558 = vlog2.pop %v521
    %v559 = vmul.f32 %v558, 0.6931472
    %v560 = vlog2.pop %v524
    %v561 = vmul.f32 %v560, 0.6931472
    %v562 = vlog2.pop %v527
    %v563 = vmul.f32 %v562, 0.6931472
    %v564 = vlog2.pop %v530
    %v565 = vmul.f32 %v564, 0.6931472
    %v566 = vlog2.pop %v533
    %v567 = vmul.f32 %v566, 0.6931472
    %v568 = vlog2.pop %v536
    %v569 = vmul.f32 %v568, 0.6931472
    %v570 = vlog2.pop %v539
    %v571 = vmul.f32 %v570, 0.6931472
    %v572 = vadd.f32 %v398, %v541
    %v573 = vadd.f32 %v401, %v543
    %v574 = vadd.f32 %v404, %v545
    %v575 = vadd.f32 %v407, %v547
    %v576 = vadd.f32 %v410, %v549
    %v577 = vadd.f32 %v413, %v551
    %v578 = vadd.f32 %v416, %v553
    %v579 = vadd.f32 %v419, %v555
    %v580 = vadd.f32 %v422, %v557
    %v581 = vadd.f32 %v425, %v559
    %v582 = vadd.f32 %v428, %v561
    %v583 = vadd.f32 %v431, %v563
    %v584 = vadd.f32 %v434, %v565
    %v585 = vadd.f32 %v437, %v567
    %v586 = vadd.f32 %v440, %v569
    %v587 = vadd.f32 %v443, %v571
    %591 = vbcast.lane.b32.xlu0 %v393, 256
    %v592 = vpop.permute.xlu0 %591
    %s594 = sor.u32 256, 8
    %595 = vbcast.lane.b32.xlu0 %v393, %s594
    %v596 = vpop.permute.xlu0 %595
    %s598 = sor.u32 256, 16
    %599 = vbcast.lane.b32.xlu0 %v393, %s598
    %v600 = vpop.permute.xlu0 %599
    %s602 = sor.u32 256, 24
    %603 = vbcast.lane.b32.xlu0 %v393, %s602
    %v604 = vpop.permute.xlu0 %603
    %s606 = sor.u32 256, 32
    %607 = vbcast.lane.b32.xlu0 %v393, %s606
    %v608 = vpop.permute.xlu0 %607
    %s610 = sor.u32 256, 40
    %611 = vbcast.lane.b32.xlu0 %v393, %s610
    %v612 = vpop.permute.xlu0 %611
    %s614 = sor.u32 256, 48
    %615 = vbcast.lane.b32.xlu0 %v393, %s614
    %v616 = vpop.permute.xlu0 %615
    %s618 = sor.u32 256, 56
    %619 = vbcast.lane.b32.xlu0 %v393, %s618
    %v620 = vpop.permute.xlu0 %619
    %622 = vbcast.lane.b32.xlu0 %v394, 256
    %v623 = vpop.permute.xlu0 %622
    %s625 = sor.u32 256, 8
    %626 = vbcast.lane.b32.xlu0 %v394, %s625
    %v627 = vpop.permute.xlu0 %626
    %s629 = sor.u32 256, 16
    %630 = vbcast.lane.b32.xlu0 %v394, %s629
    %v631 = vpop.permute.xlu0 %630
    %s633 = sor.u32 256, 24
    %634 = vbcast.lane.b32.xlu0 %v394, %s633
    %v635 = vpop.permute.xlu0 %634
    %s637 = sor.u32 256, 32
    %638 = vbcast.lane.b32.xlu0 %v394, %s637
    %v639 = vpop.permute.xlu0 %638
    %s641 = sor.u32 256, 40
    %642 = vbcast.lane.b32.xlu0 %v394, %s641
    %v643 = vpop.permute.xlu0 %642
    %s645 = sor.u32 256, 48
    %646 = vbcast.lane.b32.xlu0 %v394, %s645
    %v647 = vpop.permute.xlu0 %646
    %s649 = sor.u32 256, 56
    %650 = vbcast.lane.b32.xlu0 %v394, %s649
    %v651 = vpop.permute.xlu0 %650
    %v668 = vsub.f32 %v572, %v592
    %v669 = vsub.f32 %v573, %v596
    %v670 = vsub.f32 %v574, %v600
    %v671 = vsub.f32 %v575, %v604
    %v672 = vsub.f32 %v576, %v608
    %v673 = vsub.f32 %v577, %v612
    %v674 = vsub.f32 %v578, %v616
    %v675 = vsub.f32 %v579, %v620
    %v676 = vsub.f32 %v580, %v623
    %v677 = vsub.f32 %v581, %v627
    %v678 = vsub.f32 %v582, %v631
    %v679 = vsub.f32 %v583, %v635
    %v680 = vsub.f32 %v584, %v639
    %v681 = vsub.f32 %v585, %v643
    %v682 = vsub.f32 %v586, %v647
    %v683 = vsub.f32 %v587, %v651
    %700 = vset.pattern.permute.xlu0 0
    %701 = vperm.xlu0 %700, %v668
    %v702 = vpop.permute.xlu0 %701
    %703 = vset.pattern.permute.xlu0 0
    %704 = vperm.xlu0 %703, %v669
    %v705 = vpop.permute.xlu0 %704
    %706 = vset.pattern.permute.xlu0 0
    %707 = vperm.xlu0 %706, %v670
    %v708 = vpop.permute.xlu0 %707
    %709 = vset.pattern.permute.xlu0 0
    %710 = vperm.xlu0 %709, %v671
    %v711 = vpop.permute.xlu0 %710
    %712 = vset.pattern.permute.xlu0 0
    %713 = vperm.xlu0 %712, %v672
    %v714 = vpop.permute.xlu0 %713
    %715 = vset.pattern.permute.xlu0 0
    %716 = vperm.xlu0 %715, %v673
    %v717 = vpop.permute.xlu0 %716
    %718 = vset.pattern.permute.xlu0 0
    %719 = vperm.xlu0 %718, %v674
    %v720 = vpop.permute.xlu0 %719
    %721 = vset.pattern.permute.xlu0 0
    %722 = vperm.xlu0 %721, %v675
    %v723 = vpop.permute.xlu0 %722
    %724 = vset.pattern.permute.xlu0 0
    %725 = vperm.xlu0 %724, %v676
    %v726 = vpop.permute.xlu0 %725
    %727 = vset.pattern.permute.xlu0 0
    %728 = vperm.xlu0 %727, %v677
    %v729 = vpop.permute.xlu0 %728
    %730 = vset.pattern.permute.xlu0 0
    %731 = vperm.xlu0 %730, %v678
    %v732 = vpop.permute.xlu0 %731
    %733 = vset.pattern.permute.xlu0 0
    %734 = vperm.xlu0 %733, %v679
    %v735 = vpop.permute.xlu0 %734
    %736 = vset.pattern.permute.xlu0 0
    %737 = vperm.xlu0 %736, %v680
    %v738 = vpop.permute.xlu0 %737
    %739 = vset.pattern.permute.xlu0 0
    %740 = vperm.xlu0 %739, %v681
    %v741 = vpop.permute.xlu0 %740
    %742 = vset.pattern.permute.xlu0 0
    %743 = vperm.xlu0 %742, %v682
    %v744 = vpop.permute.xlu0 %743
    %745 = vset.pattern.permute.xlu0 0
    %746 = vperm.xlu0 %745, %v683
    %v747 = vpop.permute.xlu0 %746
    %v748 = vlaneseq
    %v749 = vand.u32 %v748, 127
    %v750 = vlaneseq
    %v751 = vshrl.u32 %v750, 7
    %v752 = vsub.s32 %v749, %v751
    %v753 = vrot.slane %v702, %v752
    %v754 = vadd.s32 %v749, 4294967288
    %v755 = vlaneseq
    %v756 = vshrl.u32 %v755, 7
    %v757 = vsub.s32 %v754, %v756
    %v758 = vrot.slane %v705, %v757
    %vm759 = vcmask 130112
    %v760 = vsel %vm759, %v758, %v753
    %v761 = vadd.s32 %v749, 4294967280
    %v762 = vlaneseq
    %v763 = vshrl.u32 %v762, 7
    %v764 = vsub.s32 %v761, %v763
    %v765 = vrot.slane %v708, %v764
    %vm766 = vcmask 195712
    %v767 = vsel %vm766, %v765, %v760
    %v768 = vadd.s32 %v749, 4294967272
    %v769 = vlaneseq
    %v770 = vshrl.u32 %v769, 7
    %v771 = vsub.s32 %v768, %v770
    %v772 = vrot.slane %v711, %v771
    %vm773 = vcmask 261312
    %v774 = vsel %vm773, %v772, %v767
    %v775 = vadd.s32 %v749, 4294967264
    %v776 = vlaneseq
    %v777 = vshrl.u32 %v776, 7
    %v778 = vsub.s32 %v775, %v777
    %v779 = vrot.slane %v714, %v778
    %vm780 = vcmask 326912
    %v781 = vsel %vm780, %v779, %v774
    %v782 = vadd.s32 %v749, 4294967256
    %v783 = vlaneseq
    %v784 = vshrl.u32 %v783, 7
    %v785 = vsub.s32 %v782, %v784
    %v786 = vrot.slane %v717, %v785
    %vm787 = vcmask 392512
    %v788 = vsel %vm787, %v786, %v781
    %v789 = vadd.s32 %v749, 4294967248
    %v790 = vlaneseq
    %v791 = vshrl.u32 %v790, 7
    %v792 = vsub.s32 %v789, %v791
    %v793 = vrot.slane %v720, %v792
    %vm794 = vcmask 458112
    %v795 = vsel %vm794, %v793, %v788
    %v796 = vadd.s32 %v749, 4294967240
    %v797 = vlaneseq
    %v798 = vshrl.u32 %v797, 7
    %v799 = vsub.s32 %v796, %v798
    %v800 = vrot.slane %v723, %v799
    %vm801 = vcmask 523712
    %v802 = vsel %vm801, %v800, %v795
    %v803 = vlaneseq
    %v804 = vshrl.u32 %v803, 7
    %v805 = vsub.s32 %v749, %v804
    %v806 = vrot.slane %v726, %v805
    %v807 = vlaneseq
    %v808 = vshrl.u32 %v807, 7
    %v809 = vsub.s32 %v754, %v808
    %v810 = vrot.slane %v729, %v809
    %v811 = vsel %vm759, %v810, %v806
    %v812 = vlaneseq
    %v813 = vshrl.u32 %v812, 7
    %v814 = vsub.s32 %v761, %v813
    %v815 = vrot.slane %v732, %v814
    %v816 = vsel %vm766, %v815, %v811
    %v817 = vlaneseq
    %v818 = vshrl.u32 %v817, 7
    %v819 = vsub.s32 %v768, %v818
    %v820 = vrot.slane %v735, %v819
    %v821 = vsel %vm773, %v820, %v816
    %v822 = vlaneseq
    %v823 = vshrl.u32 %v822, 7
    %v824 = vsub.s32 %v775, %v823
    %v825 = vrot.slane %v738, %v824
    %v826 = vsel %vm780, %v825, %v821
    %v827 = vlaneseq
    %v828 = vshrl.u32 %v827, 7
    %v829 = vsub.s32 %v782, %v828
    %v830 = vrot.slane %v741, %v829
    %v831 = vsel %vm787, %v830, %v826
    %v832 = vlaneseq
    %v833 = vshrl.u32 %v832, 7
    %v834 = vsub.s32 %v789, %v833
    %v835 = vrot.slane %v744, %v834
    %v836 = vsel %vm794, %v835, %v831
    %v837 = vlaneseq
    %v838 = vshrl.u32 %v837, 7
    %v839 = vsub.s32 %v796, %v838
    %v840 = vrot.slane %v747, %v839
    %v841 = vsel %vm801, %v840, %v836
    %vm842 = vcmask 1041409
    %v843 = vsel %vm842, %v841, %v802
    %vm845 = vcmask 517120
    %846 = vst.msk [vmem:[#allocation7] sm:$0x3] %vm845, %v843
    // Predicated region
    $region18: #{tpu_custom_call.1} parent=1 // pred_check
      _
    $region19: #{tpu_custom_call.1} parent=1 // pred_check_branch
      %848 = sbr.rel (0) target = $region21
    $region20: #{tpu_custom_call.1} parent=1 // pred_region
      %s850 = ssub.s32 32, 32
      %851 = vsyncadd [#allocation4], %s850
      %s853 = sshll.u32 [#allocation7], 4
      %s854 = int_to_ptr.vmem [resolvable:$true] %s853
      %856 = dma.vmem_to_hbm [thread:$0]  %s854, 32, %s2, [#allocation4]
    $region21: #{tpu_custom_call.1} parent=1 // pred_fallthru
      _
    // Predicated region
    $region22: #{tpu_custom_call.1} parent=1 // pred_check
      _
    $region23: #{tpu_custom_call.1} parent=1 // pred_check_branch
      %858 = sbr.rel (0) target = $region25
    $region24: #{tpu_custom_call.1} parent=1 // pred_region
      %859 = dma.done [#allocation4], 32
    $region25: #{tpu_custom_call.1} parent=1 // pred_fallthru
      _
    %860 = vsyncpa [#allocation3], 1
    %861 = vsyncpa [#allocation6], 1
    %862 = vsyncpa [#allocation4], 1

</llo_original>
